<compile_context>
chip_gen: v5e
topology: v5e:2x2
jax: 0.10.0
libtpu: 0.0.40
codegen_flags: <defaults>
</compile_context>

<pallas_src>
import jax
import jax.numpy as jnp
from jax.experimental import pallas as pl
from jax.experimental.pallas import tpu as pltpu


def _round_up(x, m):
    return ((x + m - 1) // m) * m


def _lora_qkv_kernel(x_ref, wqkv_ref, bqkv_ref, a_ref, b_ref, out_ref):
    """One row tile: out = x @ Wqkv + bias + (x @ A_big) @ B_big."""
    x = x_ref[...]                                                   # (tm, C)
    y = jnp.dot(x, wqkv_ref[...], preferred_element_type=jnp.float32)   # (tm, 3C)
    p = jnp.dot(x, a_ref[...], preferred_element_type=jnp.float32)      # (tm, nR)
    delta = jnp.dot(p.astype(b_ref.dtype), b_ref[...],
                    preferred_element_type=jnp.float32)                  # (tm, 3C)
    out_ref[...] = (y + bqkv_ref[...] + delta).astype(out_ref.dtype)


def _choose_tm(M, tm_max=256):
    # Multiple of 8 (sublane), capped at tm_max; keeps >= ~4 grid steps when M
    # is small so megacore sharding (v7x) still has work on both TensorCores.
    tm = max(8, _round_up(-(-M // 4), 8))
    return min(tm_max, tm)


def lora_qkv_forward(x, params, *, use_new=True, tm=None,
                     compute_dtype=jnp.float32):
    """x: (B, N, C).  Fused qkv projection + q/v LoRA updates."""
    B, N, C = x.shape
    M = B * N
    out_dtype = x.dtype

    # ---- fuse all LoRA branches into one (C, nR) x (nR, 3C) pair ----
    a_list = [params["a_q"], params["a_v"]]
    b_list = [("q", params["b_q"]), ("v", params["b_v"])]
    if use_new:   # static specialization: False -> smaller A_big/B_big, no zero work
        a_list += [params["new_a_q"], params["new_a_v"]]
        b_list += [("q", params["new_b_q"]), ("v", params["new_b_v"])]
    A_big = jnp.concatenate(a_list, axis=1)                   # (C, nR)
    nR = A_big.shape[1]
    B_big = jnp.zeros((nR, 3 * C), jnp.float32)
    off = 0
    for which, b_mat in b_list:
        r_i = b_mat.shape[0]
        col0 = 0 if which == "q" else 2 * C
        B_big = B_big.at[off:off + r_i, col0:col0 + C].set(b_mat)
        off += r_i

    # ---- cast matmul operands (accumulation stays f32 in the kernel) ----
    x2 = x.reshape(M, C).astype(compute_dtype)
    w_qkv = params["w_qkv"].astype(compute_dtype)
    b_qkv = params["b_qkv"].astype(jnp.float32)
    A_big = A_big.astype(compute_dtype)
    B_big = B_big.astype(compute_dtype)

    # ---- row tiling with padding (no divisibility assert) ----
    if tm is None:
        tm = _choose_tm(M)
    M_pad = _round_up(M, tm)
    if M_pad != M:
        x2 = jnp.pad(x2, ((0, M_pad - M), (0, 0)))

    full = lambda shape: pl.BlockSpec(shape, lambda i: (0, 0))

    out = pl.pallas_call(
        _lora_qkv_kernel,
        out_shape=jax.ShapeDtypeStruct((M_pad, 3 * C), out_dtype),
        grid_spec=pltpu.PrefetchScalarGridSpec(
            num_scalar_prefetch=0,
            grid=(M_pad // tm,),
            in_specs=[
                pl.BlockSpec((tm, C), lambda i: (i, 0)),   # x row tile
                full((C, 3 * C)),                          # fused qkv weight
                full((1, 3 * C)),                          # qkv bias
                full((C, nR)),                             # fused LoRA A
                full((nR, 3 * C)),                         # fused LoRA B (block-sparse)
            ],
            out_specs=pl.BlockSpec((tm, 3 * C), lambda i: (i, 0)),
        ),
        compiler_params=pltpu.CompilerParams(
            dimension_semantics=("parallel",),
            vmem_limit_bytes=64 * 1024 * 1024),
    )(x2, w_qkv, b_qkv, A_big, B_big)

    return out[:M].reshape(B, N, 3 * C)


def init_params(key, dim, r):
    """Deterministic synthetic init. LoRA linears have no bias (standard LoRA);
    qkv carries a bias (qkv_bias=True). Weights stored as (in, out)."""
    ks = jax.random.split(key, 11)
    sd = 0.02
    return {
        "w_qkv": jax.random.normal(ks[0], (dim, 3 * dim), jnp.float32) * sd,
        "b_qkv": jax.random.normal(ks[1], (1, 3 * dim), jnp.float32) * sd,
        "a_q": jax.random.normal(ks[2], (dim, r), jnp.float32) * sd,
        "b_q": jax.random.normal(ks[3], (r, dim), jnp.float32) * sd,
        "a_v": jax.random.normal(ks[4], (dim, r), jnp.float32) * sd,
        "b_v": jax.random.normal(ks[5], (r, dim), jnp.float32) * sd,
        "new_a_q": jax.random.normal(ks[6], (dim, r), jnp.float32) * sd,
        "new_b_q": jax.random.normal(ks[7], (r, dim), jnp.float32) * sd,
        "new_a_v": jax.random.normal(ks[8], (dim, r), jnp.float32) * sd,
        "new_b_v": jax.random.normal(ks[9], (r, dim), jnp.float32) * sd,
    }


def reference(x, p, use_new=True):
    qkv = jnp.einsum("bnc,cd->bnd", x, p["w_qkv"]) + p["b_qkv"][0]
    C = x.shape[-1]
    lq = (x @ p["a_q"]) @ p["b_q"]
    lv = (x @ p["a_v"]) @ p["b_v"]
    if use_new:
        lq = lq + (x @ p["new_a_q"]) @ p["new_b_q"]
        lv = lv + (x @ p["new_a_v"]) @ p["new_b_v"]
    qkv = qkv.at[:, :, :C].add(lq)
    qkv = qkv.at[:, :, -C:].add(lv)
    return qkv


if __name__ == "__main__":
    B, N, C, r = 2, 8, 32, 4
    key = jax.random.PRNGKey(0)
    kx, kp = jax.random.split(key)
    x = jax.random.normal(kx, (B, N, C), jnp.float32)
    params = init_params(kp, C, r)

    out = lora_qkv_forward(x, params, use_new=True)
    out = jax.block_until_ready(out)

    ref = reference(x, params, use_new=True)
    assert out.shape == (B, N, 3 * C)
    assert jnp.allclose(out, ref, atol=1e-5, rtol=1e-5), "mismatch vs reference"

    # also exercise the static use_new=False specialization
    out2 = jax.block_until_ready(lora_qkv_forward(x, params, use_new=False))
    ref2 = reference(x, params, use_new=False)
    assert jnp.allclose(out2, ref2, atol=1e-5, rtol=1e-5), "mismatch (use_new=False)"

    print("KERNEL_OK")
</pallas_src>

<mosaic_0001>
module attributes {stable_mosaic.version = 11 : i64} {
  func.func @_lora_qkv_kernel(%arg0: i32, %arg1: memref<8x32xf32, #tpu.memory_space<vmem>>, %arg2: memref<32x96xf32, #tpu.memory_space<vmem>>, %arg3: memref<1x96xf32, #tpu.memory_space<vmem>>, %arg4: memref<32x16xf32, #tpu.memory_space<vmem>>, %arg5: memref<16x96xf32, #tpu.memory_space<vmem>>, %arg6: memref<8x96xf32, #tpu.memory_space<vmem>>) attributes {dimension_semantics = [#tpu.dimension_semantics<parallel>], iteration_bounds = array<i64: 2>, scalar_prefetch = 0 : i64, scratch_operands = 0 : i64, tpu.core_type = #tpu.core_type<tc>, window_params = [{transform_indices = @transform_0, window_bounds = array<i64: 8, 32>}, {pipeline_mode = #tpu.pipeline_mode<synchronous>, transform_indices = @transform_1, window_bounds = array<i64: 32, 96>}, {pipeline_mode = #tpu.pipeline_mode<synchronous>, transform_indices = @transform_2, window_bounds = array<i64: 1, 96>}, {pipeline_mode = #tpu.pipeline_mode<synchronous>, transform_indices = @transform_3, window_bounds = array<i64: 32, 16>}, {pipeline_mode = #tpu.pipeline_mode<synchronous>, transform_indices = @transform_4, window_bounds = array<i64: 16, 96>}, {transform_indices = @transform_5, window_bounds = array<i64: 8, 96>}]} {
    %c0 = arith.constant 0 : index
    %c0_0 = arith.constant 0 : index
    %0 = vector.load %arg1[%c0, %c0_0] : memref<8x32xf32, #tpu.memory_space<vmem>>, vector<8x32xf32>
    %c0_1 = arith.constant 0 : index
    %c0_2 = arith.constant 0 : index
    %1 = vector.load %arg2[%c0_1, %c0_2] : memref<32x96xf32, #tpu.memory_space<vmem>>, vector<32x96xf32>
    %cst = arith.constant dense<0.000000e+00> : vector<8x96xf32>
    %2 = tpu.matmul %0, %1, %cst {dimension_numbers = #tpu.dot_dimension_numbers<[1], [0], [0], [1], [0, 0, 1, 1], [], []>} : vector<8x32xf32>, vector<32x96xf32>, vector<8x96xf32> -> vector<8x96xf32>
    %c0_3 = arith.constant 0 : index
    %c0_4 = arith.constant 0 : index
    %3 = vector.load %arg4[%c0_3, %c0_4] : memref<32x16xf32, #tpu.memory_space<vmem>>, vector<32x16xf32>
    %cst_5 = arith.constant dense<0.000000e+00> : vector<8x16xf32>
    %4 = tpu.matmul %0, %3, %cst_5 {dimension_numbers = #tpu.dot_dimension_numbers<[1], [0], [0], [1], [0, 0, 1, 1], [], []>} : vector<8x32xf32>, vector<32x16xf32>, vector<8x16xf32> -> vector<8x16xf32>
    %c0_6 = arith.constant 0 : index
    %c0_7 = arith.constant 0 : index
    %5 = vector.load %arg5[%c0_6, %c0_7] : memref<16x96xf32, #tpu.memory_space<vmem>>, vector<16x96xf32>
    %cst_8 = arith.constant dense<0.000000e+00> : vector<8x96xf32>
    %6 = tpu.matmul %4, %5, %cst_8 {dimension_numbers = #tpu.dot_dimension_numbers<[1], [0], [0], [1], [0, 0, 1, 1], [], []>} : vector<8x16xf32>, vector<16x96xf32>, vector<8x96xf32> -> vector<8x96xf32>
    %c0_9 = arith.constant 0 : index
    %c0_10 = arith.constant 0 : index
    %7 = vector.load %arg3[%c0_9, %c0_10] : memref<1x96xf32, #tpu.memory_space<vmem>>, vector<1x96xf32>
    %8 = vector.broadcast %7 : vector<1x96xf32> to vector<8x96xf32>
    %9 = arith.addf %2, %8 : vector<8x96xf32>
    %10 = arith.addf %9, %6 : vector<8x96xf32>
    %c0_11 = arith.constant 0 : index
    %c0_12 = arith.constant 0 : index
    %11 = vector.load %arg6[%c0_11, %c0_12] : memref<8x96xf32, #tpu.memory_space<vmem>>, vector<8x96xf32>
    tpu.vector_store %arg6[%c0_11, %c0_12], %10 {strides = array<i32>} : memref<8x96xf32, #tpu.memory_space<vmem>>, vector<8x96xf32>,
    return
  }
  func.func @transform_0(%arg0: i32) -> (i32, i32) {
    %c0_i32 = arith.constant 0 : i32
    %c0_i32_0 = arith.constant 0 : i32
    return %arg0, %c0_i32 : i32, i32
  }
  func.func @transform_1(%arg0: i32) -> (i32, i32) {
    %c0_i32 = arith.constant 0 : i32
    %c0_i32_0 = arith.constant 0 : i32
    %c0_i32_1 = arith.constant 0 : i32
    return %c0_i32, %c0_i32_0 : i32, i32
  }
  func.func @transform_2(%arg0: i32) -> (i32, i32) {
    %c0_i32 = arith.constant 0 : i32
    %c0_i32_0 = arith.constant 0 : i32
    %c0_i32_1 = arith.constant 0 : i32
    return %c0_i32, %c0_i32_0 : i32, i32
  }
  func.func @transform_3(%arg0: i32) -> (i32, i32) {
    %c0_i32 = arith.constant 0 : i32
    %c0_i32_0 = arith.constant 0 : i32
    %c0_i32_1 = arith.constant 0 : i32
    return %c0_i32, %c0_i32_0 : i32, i32
  }
  func.func @transform_4(%arg0: i32) -> (i32, i32) {
    %c0_i32 = arith.constant 0 : i32
    %c0_i32_0 = arith.constant 0 : i32
    %c0_i32_1 = arith.constant 0 : i32
    return %c0_i32, %c0_i32_0 : i32, i32
  }
  func.func @transform_5(%arg0: i32) -> (i32, i32) {
    %c0_i32 = arith.constant 0 : i32
    %c0_i32_0 = arith.constant 0 : i32
    return %arg0, %c0_i32 : i32, i32
  }
}

</mosaic_0001>

<llo_original>
// kernel: tpu_custom_call.1
$region0: #{tpu_custom_call.1}
  #allocation0 [shape = 'u32[]', space=smem, size = 0x4, offset = 0x4, fixed_abs, tag = 'smem constant byte address 0x4 - core index']
  #allocation1 [shape = 'u32[72,128]{1,0:T(1,128)}', space=vmem, size = 0x9000, scoped, tag = 'internal scratch']
  %s0 = inlined_call_operand.vmem [shape: f32[16,32], index: 0, kind: input, shape index: {}]
  %s1 = inlined_call_operand.vmem [shape: f32[32,96], index: 1, kind: input, shape index: {}]
  %s2 = inlined_call_operand.vmem [shape: f32[1,96], index: 2, kind: input, shape index: {}]
  %s3 = inlined_call_operand.vmem [shape: f32[32,16], index: 3, kind: input, shape index: {}]
  %s4 = inlined_call_operand.hbm [shape: f32[16,96], index: 4, kind: input, shape index: {}]
  %s5 = inlined_call_operand.hbm [shape: f32[16,96], index: 5, kind: output, shape index: {}]
  %s6 = sld [smem:[#allocation0]]
  $region57: #{tpu_custom_call.1} parent=0
    _
  %s8 = ssub.s32 1, %s6
  %s9 = scalar_select 0, %s8, %s6
  $region1: #{tpu_custom_call.1} parent=0
    #allocation2 [shape = 'u8[8192]{0}', space=vmem, size = 0x2000, scoped, tag = 'input window, operand 4, single buffered']
    #allocation3 [shape = 's32[2]{0}', space=sflag, size = 0x8, scoped, tag = 'scoped memory for tpu_custom_call.1']
    #allocation4 [shape = 's32[2]{0}', space=sflag, size = 0x8, scoped, tag = 'scoped memory for tpu_custom_call.1']
    #allocation5 [shape = 'u8[8192]{0}', space=vmem, size = 0x2000, scoped, tag = 'output window, operand 0']
    %10 = vsyncpa [#allocation3], 0
    %11 = vsyncpa [#allocation4], 0
    %s12 = scalar_lea.sflag [#allocation4], 1
    %13 = vsyncpa %s12, 0
    loop: start=0, step=1, limit=4
    $region2: #{tpu_custom_call.1} parent=1 // loop_pre_header
      _
    $region3: #{tpu_custom_call.1} parent=1 // loop_header
      %s15 = sphi 0, %s19
      %p16 = scmp.ge.s32.totalorder %s15, 4
      %s25 = sphi 0, %s27
      %s28 = sphi 0, %s25
      %s29 = sphi 0, %s28
      %s45 = sphi 0, %s29
      %s49 = sphi 0, %s49
      %s51 = sphi 0, %s49
      %s52 = sphi 0, %s51
      %s66 = sphi 0, %s52
      %s70 = sphi 0, %s70
      %s72 = sphi 0, %s70
      %s73 = sphi 0, %s72
      %s87 = sphi 0, %s73
      %s91 = sphi 0, %s91
      %s93 = sphi 0, %s91
      %s94 = sphi 0, %s93
      %s108 = sphi 0, %s94
      %s112 = sphi 0, %s112
      %s114 = sphi 0, %s112
      %s115 = sphi 0, %s114
      %s129 = sphi 0, %s115
      %s135 = sphi 0, %s137
      %s138 = sphi 0, %s135
      %s139 = sphi 0, %s138
      %s155 = sphi 0, %s139
    $region4: #{tpu_custom_call.1} parent=1 // loop_header_branch
      %18 = sbr.rel (%p16) target = $region8
    $region5: #{tpu_custom_call.1} parent=1 // loop_body
      %s20 = ssub.s32 %s15, 1
      %s21 = ssub.s32 %s15, 2
      %s22 = sadd.s32 %s15, 1
      %s23 = ssub.s32 %s15, %s22
      %p24 = scmp.eq.s32.totalorder %s23, 0
      %s26 = sadd.s32 %s25, 1
      %s27 = scalar_select %p24, %s25, %s26
      %p30 = pneg %p24
      %p31 = scmp.eq.s32.totalorder %s15, 1
      %p32 = por %p30, %p31
      %p33 = scmp.ne.s32.totalorder %s25, %s28
      %p34 = scmp.eq.s32.totalorder %s15, 0
      %p35 = por %p33, %p34
      %p36 = scmp.ne.s32.totalorder %s25, %s28
      %p37 = scmp.eq.s32.totalorder %s20, 1
      %p38 = por %p36, %p37
      %p39 = scmp.ne.s32.totalorder %s28, %s29
      %p40 = scmp.eq.s32.totalorder %s20, 0
      %p41 = por %p39, %p40
      %p42 = scmp.ne.s32.totalorder %s28, %s29
      %p43 = scmp.eq.s32.totalorder %s21, 1
      %p44 = por %p42, %p43
      %p46 = scmp.ne.s32.totalorder %s29, %s45
      %p47 = scmp.eq.s32.totalorder %s21, 0
      %p48 = por %p46, %p47
      %s50 = sadd.s32 %s49, 1
      %p53 = scmp.eq.s32.totalorder %s15, 1
      %p54 = scmp.ne.s32.totalorder %s49, %s51
      %p55 = scmp.eq.s32.totalorder %s15, 0
      %p56 = por %p54, %p55
      %p57 = scmp.ne.s32.totalorder %s49, %s51
      %p58 = scmp.eq.s32.totalorder %s20, 1
      %p59 = por %p57, %p58
      %p60 = scmp.ne.s32.totalorder %s51, %s52
      %p61 = scmp.eq.s32.totalorder %s20, 0
      %p62 = por %p60, %p61
      %p63 = scmp.ne.s32.totalorder %s51, %s52
      %p64 = scmp.eq.s32.totalorder %s21, 1
      %p65 = por %p63, %p64
      %p67 = scmp.ne.s32.totalorder %s52, %s66
      %p68 = scmp.eq.s32.totalorder %s21, 0
      %p69 = por %p67, %p68
      %s71 = sadd.s32 %s70, 1
      %p74 = scmp.eq.s32.totalorder %s15, 1
      %p75 = scmp.ne.s32.totalorder %s70, %s72
      %p76 = scmp.eq.s32.totalorder %s15, 0
      %p77 = por %p75, %p76
      %p78 = scmp.ne.s32.totalorder %s70, %s72
      %p79 = scmp.eq.s32.totalorder %s20, 1
      %p80 = por %p78, %p79
      %p81 = scmp.ne.s32.totalorder %s72, %s73
      %p82 = scmp.eq.s32.totalorder %s20, 0
      %p83 = por %p81, %p82
      %p84 = scmp.ne.s32.totalorder %s72, %s73
      %p85 = scmp.eq.s32.totalorder %s21, 1
      %p86 = por %p84, %p85
      %p88 = scmp.ne.s32.totalorder %s73, %s87
      %p89 = scmp.eq.s32.totalorder %s21, 0
      %p90 = por %p88, %p89
      %s92 = sadd.s32 %s91, 1
      %p95 = scmp.eq.s32.totalorder %s15, 1
      %p96 = scmp.ne.s32.totalorder %s91, %s93
      %p97 = scmp.eq.s32.totalorder %s15, 0
      %p98 = por %p96, %p97
      %p99 = scmp.ne.s32.totalorder %s91, %s93
      %p100 = scmp.eq.s32.totalorder %s20, 1
      %p101 = por %p99, %p100
      %p102 = scmp.ne.s32.totalorder %s93, %s94
      %p103 = scmp.eq.s32.totalorder %s20, 0
      %p104 = por %p102, %p103
      %p105 = scmp.ne.s32.totalorder %s93, %s94
      %p106 = scmp.eq.s32.totalorder %s21, 1
      %p107 = por %p105, %p106
      %p109 = scmp.ne.s32.totalorder %s94, %s108
      %p110 = scmp.eq.s32.totalorder %s21, 0
      %p111 = por %p109, %p110
      %s113 = sadd.s32 %s112, 1
      %p116 = scmp.eq.s32.totalorder %s15, 1
      %p117 = scmp.ne.s32.totalorder %s112, %s114
      %p118 = scmp.eq.s32.totalorder %s15, 0
      %p119 = por %p117, %p118
      %p120 = scmp.ne.s32.totalorder %s112, %s114
      %p121 = scmp.eq.s32.totalorder %s20, 1
      %p122 = por %p120, %p121
      %p123 = scmp.ne.s32.totalorder %s114, %s115
      %p124 = scmp.eq.s32.totalorder %s20, 0
      %p125 = por %p123, %p124
      %p126 = scmp.ne.s32.totalorder %s114, %s115
      %p127 = scmp.eq.s32.totalorder %s21, 1
      %p128 = por %p126, %p127
      %p130 = scmp.ne.s32.totalorder %s115, %s129
      %p131 = scmp.eq.s32.totalorder %s21, 0
      %p132 = por %p130, %p131
      %s133 = ssub.s32 %s15, %s22
      %p134 = scmp.eq.s32.totalorder %s133, 0
      %s136 = sadd.s32 %s135, 1
      %s137 = scalar_select %p134, %s135, %s136
      %p140 = pneg %p134
      %p141 = scmp.eq.s32.totalorder %s15, 1
      %p142 = por %p140, %p141
      %p143 = scmp.ne.s32.totalorder %s135, %s138
      %p144 = scmp.eq.s32.totalorder %s15, 0
      %p145 = por %p143, %p144
      %p146 = scmp.ne.s32.totalorder %s135, %s138
      %p147 = scmp.eq.s32.totalorder %s20, 1
      %p148 = por %p146, %p147
      %p149 = scmp.ne.s32.totalorder %s138, %s139
      %p150 = scmp.eq.s32.totalorder %s20, 0
      %p151 = por %p149, %p150
      %p152 = scmp.ne.s32.totalorder %s138, %s139
      %p153 = scmp.eq.s32.totalorder %s21, 1
      %p154 = por %p152, %p153
      %p156 = scmp.ne.s32.totalorder %s139, %s155
      %p157 = scmp.eq.s32.totalorder %s21, 0
      %p158 = por %p156, %p157
      %p159 = scmp.le.s32.totalorder 1, %s15
      %p160 = scmp.lt.s32.totalorder %s15, 3
      %p161 = pnand %p159, %p160
      %p162 = pneg %p161
      // Predicated region
      $region9: #{tpu_custom_call.1} parent=5 // pred_check
        _
      $region10: #{tpu_custom_call.1} parent=5 // pred_check_branch
        %164 = sbr.rel (%p161) target = $region12
      $region11: #{tpu_custom_call.1} parent=5 // pred_region
        %s165 = ssub.s32 %s15, 1
        // Predicated region
        $region13: #{tpu_custom_call.1} parent=11 // pred_check
          %p166 = pneg %p62
        $region14: #{tpu_custom_call.1} parent=11 // pred_check_branch
          %168 = sbr.rel (%p166) target = $region16
        $region15: #{tpu_custom_call.1} parent=11 // pred_region
          _
        $region16: #{tpu_custom_call.1} parent=11 // pred_fallthru
          _
        // Predicated region
        $region17: #{tpu_custom_call.1} parent=11 // pred_check
          %p169 = pneg %p83
        $region18: #{tpu_custom_call.1} parent=11 // pred_check_branch
          %171 = sbr.rel (%p169) target = $region20
        $region19: #{tpu_custom_call.1} parent=11 // pred_region
          _
        $region20: #{tpu_custom_call.1} parent=11 // pred_fallthru
          _
        // Predicated region
        $region21: #{tpu_custom_call.1} parent=11 // pred_check
          %p172 = pneg %p104
        $region22: #{tpu_custom_call.1} parent=11 // pred_check_branch
          %174 = sbr.rel (%p172) target = $region24
        $region23: #{tpu_custom_call.1} parent=11 // pred_region
          _
        $region24: #{tpu_custom_call.1} parent=11 // pred_fallthru
          _
        // Predicated region
        $region25: #{tpu_custom_call.1} parent=11 // pred_check
          %p175 = pneg %p125
        $region26: #{tpu_custom_call.1} parent=11 // pred_check_branch
          %177 = sbr.rel (%p175) target = $region28
        $region27: #{tpu_custom_call.1} parent=11 // pred_region
          %179 = vsyncadd [#allocation3], 0
          %s180 = sshll.u32 %s4, 4
          %s181 = int_to_ptr.hbm [resolvable:$true] %s180
          %s182 = sshll.u32 [#allocation2], 4
          %s183 = int_to_ptr.vmem [resolvable:$true] %s182
          %188 = dma.hbm_to_vmem [thread:$0]  %s181, 256, %s183, [#allocation3], 128, 128, 8
        $region28: #{tpu_custom_call.1} parent=11 // pred_fallthru
          _
      $region12: #{tpu_custom_call.1} parent=5 // pred_fallthru
        _
      %p189 = scmp.lt.s32.totalorder %s15, 2
      // Predicated region
      $region29: #{tpu_custom_call.1} parent=5 // pred_check
        %p190 = pneg %p189
      $region30: #{tpu_custom_call.1} parent=5 // pred_check_branch
        %192 = sbr.rel (%p190) target = $region32
      $region31: #{tpu_custom_call.1} parent=5 // pred_region
        // Predicated region
        $region33: #{tpu_custom_call.1} parent=31 // pred_check
          %p193 = pneg %p35
        $region34: #{tpu_custom_call.1} parent=31 // pred_check_branch
          %195 = sbr.rel (%p193) target = $region36
        $region35: #{tpu_custom_call.1} parent=31 // pred_region
          %p196 = scmp.lt.s32.totalorder %s15, 1
          %s197 = scalar_select %p196, %s15, 1
          %s198 = smul.addr %s197, 8
          %s199 = scalar_lea.vmem %s0, %s198
        $region36: #{tpu_custom_call.1} parent=31 // pred_fallthru
          _
      $region32: #{tpu_custom_call.1} parent=5 // pred_fallthru
        _
      %p200 = scmp.le.s32.totalorder 1, %s15
      %p201 = scmp.lt.s32.totalorder %s15, 3
      %p202 = pnand %p200, %p201
      %p203 = pneg %p202
      // Predicated region
      $region37: #{tpu_custom_call.1} parent=5 // pred_check
        _
      $region38: #{tpu_custom_call.1} parent=5 // pred_check_branch
        %205 = sbr.rel (%p202) target = $region40
      $region39: #{tpu_custom_call.1} parent=5 // pred_region
        %s206 = ssub.s32 %s15, 1
        // Predicated region
        $region41: #{tpu_custom_call.1} parent=39 // pred_check
          %p207 = pneg %p125
        $region42: #{tpu_custom_call.1} parent=39 // pred_check_branch
          %209 = sbr.rel (%p207) target = $region44
        $region43: #{tpu_custom_call.1} parent=39 // pred_region
          %211 = dma.done [#allocation3], 256
        $region44: #{tpu_custom_call.1} parent=39 // pred_fallthru
          _
        %p212 = scmp.lt.s32.totalorder %s20, 1
        %s213 = scalar_select %p212, %s20, 1
        %s214 = smul.addr %s213, 8
        %s215 = scalar_lea.vmem %s0, %s214
        %p216 = pneg %p41
        %p217 = pneg %p38
        %p218 = pneg %p62
        %p219 = pneg %p59
        %p220 = pneg %p83
        %p221 = pneg %p80
        %p222 = pneg %p104
        %p223 = pneg %p101
        %p224 = pneg %p125
        %p225 = pneg %p122
        %p226 = pneg %p151
        %p227 = pneg %p148
        %s228 = sand.u32 %s138, 1
        %s229 = scalar_lea.sflag [#allocation4], %s228
        %s230 = sand.u32 %s138, 1
        %s231 = smul.addr %s230, 8
        %s232 = scalar_lea.vmem [#allocation5], %s231
        %p233 = scmp.lt.s32.totalorder %s20, 1
        %s234 = scalar_select %p233, %s20, 1
        %s235 = smul.addr %s234, 8
        %s236 = scalar_lea.vmem %s0, %s235
        %v237 = vld [vmem:[%s236] sm:$0xff]
        %v238 = vld [vmem:[%s1] sm:$0xff]
        %v239 = vld [vmem:[%s1 + $0x8] sm:$0xff]
        %v240 = vld [vmem:[%s1 + $0x10] sm:$0xff]
        %v241 = vld [vmem:[%s1 + $0x18] sm:$0xff]
        %v242 = vld [vmem:[%s3] sm:$0xff]
        %v243 = vld [vmem:[%s3 + $0x8] sm:$0xff]
        %v244 = vld [vmem:[%s3 + $0x10] sm:$0xff]
        %v245 = vld [vmem:[%s3 + $0x18] sm:$0xff]
        %vm246 = vcmask 261120
        %v248 = vsel %vm246, %v237, 0
        %250 = vmatpush.msra.mxu0 0.0
        %251 = vmatpush.msra.mxu0 0.0
        %252 = vmatpush.msra.mxu0 0.0
        %253 = vmatpush.msra.mxu0 0.0
        %254 = vmatpush.msra.mxu0 0.0
        %255 = vmatpush.msra.mxu0 0.0
        %256 = vmatpush.msra.mxu0 0.0
        %257 = vmatpush.msra.mxu0 0.0
        %258 = vmatpush.msra.mxu0 0.0
        %259 = vmatpush.msra.mxu0 0.0
        %260 = vmatpush.msra.mxu0 0.0
        %261 = vmatpush.msra.mxu0 0.0
        %262 = vmatpush.msra.mxu0 %v245
        %263 = vmatpush.msra.mxu0 %v244
        %264 = vmatpush.msra.mxu0 %v243
        %265 = vmatpush.msra.mxu0 %v242
        %266 = vmatmul.f32.gmra.mxu0 %v248
        %v267 = vpop.f32.mrf.mxu0
        %v268 = vadd.f32 0.0, %v267
        %269 = vdwg.mxu0
        %v270 = vld [vmem:[#allocation2] sm:$0xff]
        %v271 = vld [vmem:[#allocation2 + $0x8] sm:$0xff]
        %vm272 = vcmask 130048
        %v274 = vsel %vm272, %v268, 0
        %276 = vmatpush.msra.mxu0 0.0
        %277 = vmatpush.msra.mxu0 0.0
        %278 = vmatpush.msra.mxu0 0.0
        %279 = vmatpush.msra.mxu0 0.0
        %280 = vmatpush.msra.mxu0 0.0
        %281 = vmatpush.msra.mxu0 0.0
        %282 = vmatpush.msra.mxu0 0.0
        %283 = vmatpush.msra.mxu0 0.0
        %284 = vmatpush.msra.mxu0 0.0
        %285 = vmatpush.msra.mxu0 0.0
        %286 = vmatpush.msra.mxu0 0.0
        %287 = vmatpush.msra.mxu0 0.0
        %288 = vmatpush.msra.mxu0 0.0
        %289 = vmatpush.msra.mxu0 0.0
        %290 = vmatpush.msra.mxu0 %v271
        %291 = vmatpush.msra.mxu0 %v270
        %292 = vmatmul.f32.gmra.mxu0 %v274
        %v293 = vpop.f32.mrf.mxu0
        %v294 = vadd.f32 0.0, %v293
        %295 = vdwg.mxu0
        %v296 = vld [vmem:[%s2] sm:$0x1]
        %v298 = vperm.slane %v296, 0
        %300 = vmatpush.msra.mxu0 0.0
        %301 = vmatpush.msra.mxu0 0.0
        %302 = vmatpush.msra.mxu0 0.0
        %303 = vmatpush.msra.mxu0 0.0
        %304 = vmatpush.msra.mxu0 0.0
        %305 = vmatpush.msra.mxu0 0.0
        %306 = vmatpush.msra.mxu0 0.0
        %307 = vmatpush.msra.mxu0 0.0
        %308 = vmatpush.msra.mxu0 0.0
        %309 = vmatpush.msra.mxu0 0.0
        %310 = vmatpush.msra.mxu0 0.0
        %311 = vmatpush.msra.mxu0 0.0
        %312 = vmatpush.msra.mxu0 %v241
        %313 = vmatpush.msra.mxu0 %v240
        %314 = vmatpush.msra.mxu0 %v239
        %315 = vmatpush.msra.mxu0 %v238
        %316 = vmatmul.f32.gmra.mxu0 %v248
        %v317 = vpop.f32.mrf.mxu0
        %v318 = vadd.f32 %v298, %v317
        %319 = vdwg.mxu0
        %v320 = vadd.f32 %v318, %v294
        %vm321 = vcmask 785408
        %322 = vst.msk [vmem:[%s232] sm:$0xff] %vm321, %v320
        %s323 = sand.u32 %s138, 1
        %s324 = scalar_lea.sflag [#allocation4], %s323
        %s325 = sand.u32 %s138, 1
        %s326 = smul.addr %s325, 8
        %s327 = scalar_lea.vmem [#allocation5], %s326
        // Predicated region
        $region45: #{tpu_custom_call.1} parent=39 // pred_check
          %p328 = pneg %p148
        $region46: #{tpu_custom_call.1} parent=39 // pred_check_branch
          %330 = sbr.rel (%p328) target = $region48
        $region47: #{tpu_custom_call.1} parent=39 // pred_region
          %332 = vsyncadd %s324, 0
          %s333 = smul.addr %s20, 8
          %s334 = scalar_lea.hbm %s5, %s333
          %s336 = sshll.u32 %s327, 4
          %s337 = int_to_ptr.vmem [resolvable:$true] %s336
          %s338 = sshll.u32 %s334, 4
          %s339 = int_to_ptr.hbm [resolvable:$true] %s338
          %341 = dma.vmem_to_hbm [thread:$0]  %s337, 128, %s339, %s324
        $region48: #{tpu_custom_call.1} parent=39 // pred_fallthru
          _
      $region40: #{tpu_custom_call.1} parent=5 // pred_fallthru
        _
      %p342 = scmp.le.s32.totalorder 2, %s15
      // Predicated region
      $region49: #{tpu_custom_call.1} parent=5 // pred_check
        %p343 = pneg %p342
      $region50: #{tpu_custom_call.1} parent=5 // pred_check_branch
        %345 = sbr.rel (%p343) target = $region52
      $region51: #{tpu_custom_call.1} parent=5 // pred_region
        %s346 = ssub.s32 %s15, 2
        // Predicated region
        $region53: #{tpu_custom_call.1} parent=51 // pred_check
          %p347 = pneg %p154
        $region54: #{tpu_custom_call.1} parent=51 // pred_check_branch
          %349 = sbr.rel (%p347) target = $region56
        $region55: #{tpu_custom_call.1} parent=51 // pred_region
          %s350 = sand.u32 %s139, 1
          %s351 = scalar_lea.sflag [#allocation4], %s350
          %s352 = sand.u32 %s139, 1
          %s353 = smul.addr %s352, 8
          %s354 = scalar_lea.vmem [#allocation5], %s353
          %356 = dma.done %s351, 128
        $region56: #{tpu_custom_call.1} parent=51 // pred_fallthru
          _
      $region52: #{tpu_custom_call.1} parent=5 // pred_fallthru
        _
    $region6: #{tpu_custom_call.1} parent=1 // loop_footer
      %s19 = sadd.s32 1, %s15
    $region7: #{tpu_custom_call.1} parent=1 // loop_footer_branch
      %14 = sbr.rel target = $region3
    $region8: #{tpu_custom_call.1} parent=1 // loop_exit
      _
    %357 = vsyncpa [#allocation3], 1
    %s358 = scalar_lea.sflag [#allocation3], 1
    %359 = vsyncpa %s358, 1
    %360 = vsyncpa [#allocation4], 1
    %s361 = scalar_lea.sflag [#allocation4], 1
    %362 = vsyncpa %s361, 1

</llo_original>
